<compile_context>
chip_gen: v7x
topology: tpu7x:2x2x1
jax: 0.10.0
libtpu: 0.0.40
codegen_flags: <defaults>
</compile_context>

<pallas_src>
import functools

import jax
import jax.numpy as jnp
from jax.experimental import pallas as pl
from jax.experimental.pallas import tpu as pltpu


def _ffn_kernel(x_ref, w1_ref, b1_ref, w2_ref, b2_ref, o_ref, *scratch,
                acc_is_out):
    """One (M, N, H) grid step of Y = relu(X @ W1t + b1) @ W2t + b2."""
    acc_ref = o_ref if acc_is_out else scratch[0]
    h_idx = pl.program_id(2)

    # Fold b2 into the accumulator init (no separate epilogue add).
    @pl.when(h_idx == 0)
    def _():
        acc_ref[...] = jnp.broadcast_to(
            b2_ref[...].astype(jnp.float32), acc_ref.shape)

    xv = x_ref[...]
    if xv.dtype != w1_ref.dtype:           # bf16 MXU path: cast activations too
        xv = xv.astype(w1_ref.dtype)

    # dense1 slice: (TM, d_in) @ (d_in, TH) -> (TM, TH), f32 on the MXU.
    hid = jnp.dot(xv, w1_ref[...], preferred_element_type=jnp.float32)
    hid = jnp.maximum(hid + b1_ref[...].astype(jnp.float32), 0.0)

    # dense2 slice: (TM, TH) @ (TH, TN) -> (TM, TN), accumulated over H tiles.
    acc_ref[...] += jnp.dot(hid.astype(w2_ref.dtype), w2_ref[...],
                            preferred_element_type=jnp.float32)

    if not acc_is_out:
        @pl.when(h_idx == pl.num_programs(2) - 1)
        def _():
            o_ref[...] = acc_ref[...].astype(o_ref.dtype)


def _round_up(x, n):
    return -(-x // n) * n


def _vmem_budget_bytes():
    """Per-generation VMEM limit: ~40 MiB on 64-MiB/TC chips (v7x),
    ~96 MiB on 128-MiB chips (v5e/v6e)."""
    cap = 64 * 1024 * 1024
    try:
        info = pltpu.get_tpu_info()
        cap = int(getattr(info, "vmem_capacity_bytes", cap))
    except Exception:
        pass
    if cap <= 64 * 1024 * 1024:
        return 40 * 1024 * 1024
    return 96 * 1024 * 1024


def _block_vmem_bytes(tm, tn, th, d_in, x_isz, w_isz, o_isz):
    """Conservative per-step VMEM footprint: double-buffered blocks + f32
    accumulator + f32 hidden intermediate."""
    b = 2 * tm * d_in * x_isz        # X blocks
    b += 2 * d_in * th * w_isz       # W1^T blocks
    b += 2 * th * w_isz              # b1 blocks
    b += 2 * th * tn * w_isz         # W2^T blocks
    b += 2 * tn * w_isz              # b2 blocks
    b += 2 * tm * tn * o_isz         # output blocks
    b += tm * tn * 4                 # f32 accumulator (scratch or output)
    b += tm * th * 4                 # f32 hidden intermediate
    return b


def _select_tiles(m, d_in, hidden, d_out, x_isz, w_isz, o_isz, budget):
    """Pick (tm, tn, th).  Preference:
       1) fully VMEM-resident weights (th == hidden -> weights DMA'd once),
          with the largest M tile that fits;
       2) otherwise tile hidden, keeping TM as large as possible (TM sets the
          flop/weight-byte intensity of the re-streamed weights)."""
    # M tile: >= 2 blocks when m > 8 (v7x megacore), target <= 1024 rows.
    if m <= 8:
        tm0 = m
    else:
        tm0 = min(1024, _round_up(pl.cdiv(m, 2), 8))
    tm_cands = []
    t = tm0
    while True:
        tm_cands.append(t)
        if t <= 8:
            break
        t = max(8, _round_up(t // 2, 8))

    tn_cands = [d_out] + [t for t in (2048, 1024, 512, 256, 128)
                          if t < d_out and d_out % t == 0]
    th_cands = [hidden] + [t for t in (2048, 1024, 512, 256, 128)
                           if t < hidden and hidden % t == 0]

    # Regime A: resident weights (single reduction step, weights read once).
    for tn in tn_cands:
        for tm in tm_cands:
            if _block_vmem_bytes(tm, tn, hidden, d_in, x_isz, w_isz, o_isz) <= budget:
                return tm, tn, hidden
    # Regime B: streamed weights; biggest TM first.
    for tm in tm_cands:
        for th in th_cands[1:]:
            for tn in tn_cands:
                if _block_vmem_bytes(tm, tn, th, d_in, x_isz, w_isz, o_isz) <= budget:
                    return tm, tn, th
    # Fallback: smallest candidates.
    return tm_cands[-1], tn_cands[-1], th_cands[-1]


def position_wise_ffn(x, w1, b1, w2, b2, *, mxu_dtype=None):
    """x: (batch, seq, d_in); w1: (hidden, d_in); b1: (hidden,);
       w2: (d_out, hidden); b2: (d_out,)  -- PyTorch nn.Linear conventions.

    mxu_dtype: optional lower-precision dtype (e.g. jnp.bfloat16) for the MXU
    operands; accumulation stays f32 and the output keeps x.dtype.
    """
    batch, seq, d_in = x.shape
    hidden = w1.shape[0]
    d_out = w2.shape[0]
    m = batch * seq

    # One-time wrapper-side transposes -> canonical (M,K)@(K,N) dots in-kernel.
    w1t = w1.T                      # (d_in, hidden)
    w2t = w2.T                      # (hidden, d_out)
    if mxu_dtype is not None:
        w1t = w1t.astype(mxu_dtype)
        w2t = w2t.astype(mxu_dtype)

    out_dtype = x.dtype
    x_isz = jnp.dtype(x.dtype).itemsize
    w_isz = jnp.dtype(w1t.dtype).itemsize
    o_isz = jnp.dtype(out_dtype).itemsize

    vmem_limit = _vmem_budget_bytes()
    tile_budget = int(vmem_limit * 0.8)      # headroom for compiler scratch
    tm, tn, th = _select_tiles(m, d_in, hidden, d_out,
                               x_isz, w_isz, o_isz, tile_budget)

    n_m = pl.cdiv(m, tm)
    n_n = d_out // tn
    n_h = hidden // th
    grid = (n_m, n_n, n_h)

    x2d = x.reshape(m, d_in)
    b1_2d = b1.reshape(1, hidden)
    b2_2d = b2.reshape(1, d_out)

    # Weight bytes reflect actual re-streaming under the chosen BlockSpecs.
    w1_passes = 1 if n_h == 1 else n_m * n_n
    w2_passes = 1 if (n_h == 1 and n_n == 1) else n_m
    cost = pl.CostEstimate(
        flops=2 * m * hidden * (d_in + d_out),
        transcendentals=0,
        bytes_accessed=(m * d_in * x_isz + m * d_out * o_isz
                        + w1_passes * hidden * d_in * w_isz
                        + w2_passes * hidden * d_out * w_isz
                        + (hidden + d_out) * w_isz),
    )

    acc_is_out = (jnp.dtype(out_dtype) == jnp.float32)
    scratch_shapes = [] if acc_is_out else [pltpu.VMEM((tm, tn), jnp.float32)]
    kernel = functools.partial(_ffn_kernel, acc_is_out=acc_is_out)

    out2d = pl.pallas_call(
        kernel,
        out_shape=jax.ShapeDtypeStruct((m, d_out), out_dtype),
        grid_spec=pltpu.PrefetchScalarGridSpec(
            num_scalar_prefetch=0,
            grid=grid,
            in_specs=[
                # X tile: varies with M only; resident across (N, H).
                pl.BlockSpec((tm, d_in), lambda i, j, h: (i, 0)),
                # W1^T tile (d_in, TH): constant block index when th == hidden
                # -> DMA'd from HBM exactly once for the whole kernel.
                pl.BlockSpec((d_in, th), lambda i, j, h: (0, h)),
                # b1 tile (1, TH).
                pl.BlockSpec((1, th), lambda i, j, h: (0, h)),
                # W2^T tile (TH, TN).
                pl.BlockSpec((th, tn), lambda i, j, h: (h, j)),
                # b2 tile (1, TN).
                pl.BlockSpec((1, tn), lambda i, j, h: (0, j)),
            ],
            out_specs=pl.BlockSpec((tm, tn), lambda i, j, h: (i, j)),
            scratch_shapes=scratch_shapes,
        ),
        compiler_params=pltpu.CompilerParams(
            dimension_semantics=("parallel", "parallel", "arbitrary"),
            vmem_limit_bytes=vmem_limit,
        ),
        cost_estimate=cost,
    )(x2d, w1t, b1_2d, w2t, b2_2d)

    return out2d.reshape(batch, seq, d_out)


if __name__ == "__main__":
    # Small shapes consistent with the module's forward:
    # batch=2, seq=8, ffn_num_input=32, ffn_num_hiddens=64, ffn_num_outputs=32
    batch, seq = 2, 8
    d_in, hidden, d_out = 32, 64, 32

    key = jax.random.PRNGKey(0)
    kx, kw1, kb1, kw2, kb2 = jax.random.split(key, 5)

    x = jax.random.normal(kx, (batch, seq, d_in), dtype=jnp.float32)
    # Deterministic parameter init (synthetic; matches nn.Linear shapes).
    w1 = jax.random.normal(kw1, (hidden, d_in), dtype=jnp.float32) * 0.1
    b1 = jax.random.normal(kb1, (hidden,), dtype=jnp.float32) * 0.1
    w2 = jax.random.normal(kw2, (d_out, hidden), dtype=jnp.float32) * 0.1
    b2 = jax.random.normal(kb2, (d_out,), dtype=jnp.float32) * 0.1

    # Pure-JAX reference.
    ref = jnp.maximum(x @ w1.T + b1, 0.0) @ w2.T + b2

    # Default f32 path.
    out = position_wise_ffn(x, w1, b1, w2, b2)
    jax.block_until_ready(out)
    assert out.shape == (batch, seq, d_out)
    assert jnp.allclose(out, ref, atol=1e-5, rtol=1e-5)

    # Optional bf16 MXU path (halved weight HBM bytes, higher MXU throughput).
    out_bf16 = position_wise_ffn(x, w1, b1, w2, b2, mxu_dtype=jnp.bfloat16)
    jax.block_until_ready(out_bf16)
    assert jnp.allclose(out_bf16, ref, atol=5e-2, rtol=5e-2)

    print("KERNEL_OK")
</pallas_src>

<mosaic_0001>
module attributes {stable_mosaic.version = 11 : i64} {
  func.func @_ffn_kernel(%arg0: i32, %arg1: i32, %arg2: i32, %arg3: memref<8x32xf32, #tpu.memory_space<vmem>>, %arg4: memref<32x64xf32, #tpu.memory_space<vmem>>, %arg5: memref<1x64xf32, #tpu.memory_space<vmem>>, %arg6: memref<64x32xf32, #tpu.memory_space<vmem>>, %arg7: memref<1x32xf32, #tpu.memory_space<vmem>>, %arg8: memref<8x32xf32, #tpu.memory_space<vmem>>) attributes {dimension_semantics = [#tpu.dimension_semantics<parallel>, #tpu.dimension_semantics<parallel>, #tpu.dimension_semantics<arbitrary>], iteration_bounds = array<i64: 2, 1, 1>, scalar_prefetch = 0 : i64, scratch_operands = 0 : i64, tpu.core_type = #tpu.core_type<tc>, window_params = [{transform_indices = @transform_0, window_bounds = array<i64: 8, 32>}, {transform_indices = @transform_1, window_bounds = array<i64: 32, 64>}, {transform_indices = @transform_2, window_bounds = array<i64: 1, 64>}, {transform_indices = @transform_3, window_bounds = array<i64: 64, 32>}, {transform_indices = @transform_4, window_bounds = array<i64: 1, 32>}, {transform_indices = @transform_5, window_bounds = array<i64: 8, 32>}]} {
    %c0_i32 = arith.constant 0 : i32
    %0 = arith.cmpi eq, %arg2, %c0_i32 : i32
    %1 = arith.extui %0 : i1 to i32
    %c0_i32_0 = arith.constant 0 : i32
    %2 = arith.cmpi ne, %1, %c0_i32_0 : i32
    scf.if %2 {
      %c0_14 = arith.constant 0 : index
      %c0_15 = arith.constant 0 : index
      %16 = vector.load %arg7[%c0_14, %c0_15] : memref<1x32xf32, #tpu.memory_space<vmem>>, vector<1x32xf32>
      %17 = vector.shape_cast %16 : vector<1x32xf32> to vector<1x32xf32>
      %18 = vector.broadcast %17 : vector<1x32xf32> to vector<8x32xf32>
      %c0_16 = arith.constant 0 : index
      %c0_17 = arith.constant 0 : index
      %19 = vector.load %arg8[%c0_16, %c0_17] : memref<8x32xf32, #tpu.memory_space<vmem>>, vector<8x32xf32>
      tpu.vector_store %arg8[%c0_16, %c0_17], %18 {strides = array<i32>} : memref<8x32xf32, #tpu.memory_space<vmem>>, vector<8x32xf32>,
    } else {
    }
    %c0 = arith.constant 0 : index
    %c0_1 = arith.constant 0 : index
    %3 = vector.load %arg3[%c0, %c0_1] : memref<8x32xf32, #tpu.memory_space<vmem>>, vector<8x32xf32>
    %c0_2 = arith.constant 0 : index
    %c0_3 = arith.constant 0 : index
    %4 = vector.load %arg4[%c0_2, %c0_3] : memref<32x64xf32, #tpu.memory_space<vmem>>, vector<32x64xf32>
    %cst = arith.constant dense<0.000000e+00> : vector<8x64xf32>
    %5 = tpu.matmul %3, %4, %cst {dimension_numbers = #tpu.dot_dimension_numbers<[1], [0], [0], [1], [0, 0, 1, 1], [], []>} : vector<8x32xf32>, vector<32x64xf32>, vector<8x64xf32> -> vector<8x64xf32>
    %c0_4 = arith.constant 0 : index
    %c0_5 = arith.constant 0 : index
    %6 = vector.load %arg5[%c0_4, %c0_5] : memref<1x64xf32, #tpu.memory_space<vmem>>, vector<1x64xf32>
    %7 = vector.broadcast %6 : vector<1x64xf32> to vector<8x64xf32>
    %8 = arith.addf %5, %7 : vector<8x64xf32>
    %cst_6 = arith.constant 0.000000e+00 : f32
    %9 = vector.broadcast %cst_6 : f32 to vector<8x64xf32>
    %10 = arith.maximumf %8, %9 : vector<8x64xf32>
    %c0_7 = arith.constant 0 : index
    %c0_8 = arith.constant 0 : index
    %11 = vector.load %arg8[%c0_7, %c0_8] : memref<8x32xf32, #tpu.memory_space<vmem>>, vector<8x32xf32>
    %c0_9 = arith.constant 0 : index
    %c0_10 = arith.constant 0 : index
    %12 = vector.load %arg6[%c0_9, %c0_10] : memref<64x32xf32, #tpu.memory_space<vmem>>, vector<64x32xf32>
    %cst_11 = arith.constant dense<0.000000e+00> : vector<8x32xf32>
    %13 = tpu.matmul %10, %12, %cst_11 {dimension_numbers = #tpu.dot_dimension_numbers<[1], [0], [0], [1], [0, 0, 1, 1], [], []>} : vector<8x64xf32>, vector<64x32xf32>, vector<8x32xf32> -> vector<8x32xf32>
    %14 = arith.addf %11, %13 : vector<8x32xf32>
    %c0_12 = arith.constant 0 : index
    %c0_13 = arith.constant 0 : index
    %15 = vector.load %arg8[%c0_12, %c0_13] : memref<8x32xf32, #tpu.memory_space<vmem>>, vector<8x32xf32>
    tpu.vector_store %arg8[%c0_12, %c0_13], %14 {strides = array<i32>} : memref<8x32xf32, #tpu.memory_space<vmem>>, vector<8x32xf32>,
    return
  }
  func.func @transform_0(%arg0: i32, %arg1: i32, %arg2: i32) -> (i32, i32) {
    %c0_i32 = arith.constant 0 : i32
    %c0_i32_0 = arith.constant 0 : i32
    return %arg0, %c0_i32 : i32, i32
  }
  func.func @transform_1(%arg0: i32, %arg1: i32, %arg2: i32) -> (i32, i32) {
    %c0_i32 = arith.constant 0 : i32
    %c0_i32_0 = arith.constant 0 : i32
    return %c0_i32, %arg2 : i32, i32
  }
  func.func @transform_2(%arg0: i32, %arg1: i32, %arg2: i32) -> (i32, i32) {
    %c0_i32 = arith.constant 0 : i32
    %c0_i32_0 = arith.constant 0 : i32
    return %c0_i32, %arg2 : i32, i32
  }
  func.func @transform_3(%arg0: i32, %arg1: i32, %arg2: i32) -> (i32, i32) {
    %c0_i32 = arith.constant 0 : i32
    return %arg2, %arg1 : i32, i32
  }
  func.func @transform_4(%arg0: i32, %arg1: i32, %arg2: i32) -> (i32, i32) {
    %c0_i32 = arith.constant 0 : i32
    %c0_i32_0 = arith.constant 0 : i32
    return %c0_i32, %arg1 : i32, i32
  }
  func.func @transform_5(%arg0: i32, %arg1: i32, %arg2: i32) -> (i32, i32) {
    %c0_i32 = arith.constant 0 : i32
    return %arg0, %arg1 : i32, i32
  }
}

</mosaic_0001>

<llo_original>
// kernel: tpu_custom_call.1
$region0: #{tpu_custom_call.1}
  #allocation0 [shape = 'u32[]', space=smem, size = 0x4, offset = 0x4, fixed_abs, tag = 'smem constant byte address 0x4 - core index']
  #allocation1 [shape = 'u32[144,128]{1,0:T(1,128)}', space=vmem, size = 0x12000, scoped, tag = 'internal scratch']
  %s0 = inlined_call_operand.vmem [shape: f32[16,32], index: 0, kind: input, shape index: {}]
  %s1 = inlined_call_operand.vmem [shape: f32[32,64], index: 1, kind: input, shape index: {}]
  %s2 = inlined_call_operand.vmem [shape: f32[1,64], index: 2, kind: input, shape index: {}]
  %s3 = inlined_call_operand.vmem [shape: f32[64,32], index: 3, kind: input, shape index: {}]
  %s4 = inlined_call_operand.vmem [shape: f32[1,32], index: 4, kind: input, shape index: {}]
  %s5 = inlined_call_operand.hbm [shape: f32[16,32], index: 5, kind: output, shape index: {}]
  %s6 = sld [smem:[#allocation0]]
  $region57: #{tpu_custom_call.1} parent=0
    _
  %s8 = ssub.s32 1, %s6
  %s9 = scalar_select 0, %s8, %s6
  $region1: #{tpu_custom_call.1} parent=0
    #allocation2 [shape = 'u8[8192]{0}', space=vmem, size = 0x2000, scoped, tag = 'output window, operand 0']
    #allocation3 [shape = 's32[2]{0}', space=sflag, size = 0x8, scoped, tag = 'scoped memory for tpu_custom_call.1']
    %10 = vsyncpa [#allocation3], 0
    %s11 = scalar_lea.sflag [#allocation3], 1
    %12 = vsyncpa %s11, 0
    loop: start=0, step=1, limit=4
    $region2: #{tpu_custom_call.1} parent=1 // loop_pre_header
      _
    $region3: #{tpu_custom_call.1} parent=1 // loop_header
      %s14 = sphi 0, %s18
      %p15 = scmp.ge.s32.totalorder %s14, 4
      %s21 = sphi 0, %s40
      %s22 = sphi 0, %s36
      %s23 = sphi 0, %s32
      %s24 = sphi 0, %s21
      %s25 = sphi 0, %s22
      %s26 = sphi 0, %s23
      %s27 = sphi 0, %s24
      %s28 = sphi 0, %s25
      %s29 = sphi 0, %s26
      %s43 = sphi 0, %s45
      %s46 = sphi 0, %s43
      %s47 = sphi 0, %s46
      %s63 = sphi 0, %s47
      %s69 = sphi 0, %s71
      %s72 = sphi 0, %s69
      %s73 = sphi 0, %s72
      %s89 = sphi 0, %s73
      %s95 = sphi 0, %s97
      %s98 = sphi 0, %s95
      %s99 = sphi 0, %s98
      %s115 = sphi 0, %s99
      %s123 = sphi 0, %s125
      %s126 = sphi 0, %s123
      %s127 = sphi 0, %s126
      %s143 = sphi 0, %s127
      %s149 = sphi 0, %s151
      %s152 = sphi 0, %s149
      %s153 = sphi 0, %s152
      %s169 = sphi 0, %s153
      %s177 = sphi 0, %s179
      %s180 = sphi 0, %s177
      %s181 = sphi 0, %s180
      %s197 = sphi 0, %s181
    $region4: #{tpu_custom_call.1} parent=1 // loop_header_branch
      %17 = sbr.rel (%p15) target = $region8
    $region5: #{tpu_custom_call.1} parent=1 // loop_body
      %s19 = ssub.s32 %s14, 1
      %s20 = ssub.s32 %s14, 2
      %s30 = sadd.s32 1, %s23
      %p31 = scmp.ge.s32.totalorder %s30, 1
      %s32 = scalar_select %p31, 0, %s30
      %s33 = sadd.s32 1, %s22
      %s34 = scalar_select %p31, %s33, %s22
      %p35 = scmp.ge.s32.totalorder %s34, 1
      %s36 = scalar_select %p35, 0, %s34
      %s37 = sadd.s32 1, %s21
      %s38 = scalar_select %p35, %s37, %s21
      %p39 = scmp.ge.s32.totalorder %s38, 2
      %s40 = scalar_select %p39, 0, %s38
      %s41 = ssub.s32 %s21, %s40
      %p42 = scmp.eq.s32.totalorder %s41, 0
      %s44 = sadd.s32 %s43, 1
      %s45 = scalar_select %p42, %s43, %s44
      %p48 = pneg %p42
      %p49 = scmp.eq.s32.totalorder %s14, 1
      %p50 = por %p48, %p49
      %p51 = scmp.ne.s32.totalorder %s43, %s46
      %p52 = scmp.eq.s32.totalorder %s14, 0
      %p53 = por %p51, %p52
      %p54 = scmp.ne.s32.totalorder %s43, %s46
      %p55 = scmp.eq.s32.totalorder %s19, 1
      %p56 = por %p54, %p55
      %p57 = scmp.ne.s32.totalorder %s46, %s47
      %p58 = scmp.eq.s32.totalorder %s19, 0
      %p59 = por %p57, %p58
      %p60 = scmp.ne.s32.totalorder %s46, %s47
      %p61 = scmp.eq.s32.totalorder %s20, 1
      %p62 = por %p60, %p61
      %p64 = scmp.ne.s32.totalorder %s47, %s63
      %p65 = scmp.eq.s32.totalorder %s20, 0
      %p66 = por %p64, %p65
      %s67 = ssub.s32 %s23, %s32
      %p68 = scmp.eq.s32.totalorder %s67, 0
      %s70 = sadd.s32 %s69, 1
      %s71 = scalar_select %p68, %s69, %s70
      %p74 = pneg %p68
      %p75 = scmp.eq.s32.totalorder %s14, 1
      %p76 = por %p74, %p75
      %p77 = scmp.ne.s32.totalorder %s69, %s72
      %p78 = scmp.eq.s32.totalorder %s14, 0
      %p79 = por %p77, %p78
      %p80 = scmp.ne.s32.totalorder %s69, %s72
      %p81 = scmp.eq.s32.totalorder %s19, 1
      %p82 = por %p80, %p81
      %p83 = scmp.ne.s32.totalorder %s72, %s73
      %p84 = scmp.eq.s32.totalorder %s19, 0
      %p85 = por %p83, %p84
      %p86 = scmp.ne.s32.totalorder %s72, %s73
      %p87 = scmp.eq.s32.totalorder %s20, 1
      %p88 = por %p86, %p87
      %p90 = scmp.ne.s32.totalorder %s73, %s89
      %p91 = scmp.eq.s32.totalorder %s20, 0
      %p92 = por %p90, %p91
      %s93 = ssub.s32 %s23, %s32
      %p94 = scmp.eq.s32.totalorder %s93, 0
      %s96 = sadd.s32 %s95, 1
      %s97 = scalar_select %p94, %s95, %s96
      %p100 = pneg %p94
      %p101 = scmp.eq.s32.totalorder %s14, 1
      %p102 = por %p100, %p101
      %p103 = scmp.ne.s32.totalorder %s95, %s98
      %p104 = scmp.eq.s32.totalorder %s14, 0
      %p105 = por %p103, %p104
      %p106 = scmp.ne.s32.totalorder %s95, %s98
      %p107 = scmp.eq.s32.totalorder %s19, 1
      %p108 = por %p106, %p107
      %p109 = scmp.ne.s32.totalorder %s98, %s99
      %p110 = scmp.eq.s32.totalorder %s19, 0
      %p111 = por %p109, %p110
      %p112 = scmp.ne.s32.totalorder %s98, %s99
      %p113 = scmp.eq.s32.totalorder %s20, 1
      %p114 = por %p112, %p113
      %p116 = scmp.ne.s32.totalorder %s99, %s115
      %p117 = scmp.eq.s32.totalorder %s20, 0
      %p118 = por %p116, %p117
      %s119 = ssub.s32 %s23, %s32
      %s120 = ssub.s32 %s22, %s36
      %s121 = sor.u32 %s119, %s120
      %p122 = scmp.eq.s32.totalorder %s121, 0
      %s124 = sadd.s32 %s123, 1
      %s125 = scalar_select %p122, %s123, %s124
      %p128 = pneg %p122
      %p129 = scmp.eq.s32.totalorder %s14, 1
      %p130 = por %p128, %p129
      %p131 = scmp.ne.s32.totalorder %s123, %s126
      %p132 = scmp.eq.s32.totalorder %s14, 0
      %p133 = por %p131, %p132
      %p134 = scmp.ne.s32.totalorder %s123, %s126
      %p135 = scmp.eq.s32.totalorder %s19, 1
      %p136 = por %p134, %p135
      %p137 = scmp.ne.s32.totalorder %s126, %s127
      %p138 = scmp.eq.s32.totalorder %s19, 0
      %p139 = por %p137, %p138
      %p140 = scmp.ne.s32.totalorder %s126, %s127
      %p141 = scmp.eq.s32.totalorder %s20, 1
      %p142 = por %p140, %p141
      %p144 = scmp.ne.s32.totalorder %s127, %s143
      %p145 = scmp.eq.s32.totalorder %s20, 0
      %p146 = por %p144, %p145
      %s147 = ssub.s32 %s22, %s36
      %p148 = scmp.eq.s32.totalorder %s147, 0
      %s150 = sadd.s32 %s149, 1
      %s151 = scalar_select %p148, %s149, %s150
      %p154 = pneg %p148
      %p155 = scmp.eq.s32.totalorder %s14, 1
      %p156 = por %p154, %p155
      %p157 = scmp.ne.s32.totalorder %s149, %s152
      %p158 = scmp.eq.s32.totalorder %s14, 0
      %p159 = por %p157, %p158
      %p160 = scmp.ne.s32.totalorder %s149, %s152
      %p161 = scmp.eq.s32.totalorder %s19, 1
      %p162 = por %p160, %p161
      %p163 = scmp.ne.s32.totalorder %s152, %s153
      %p164 = scmp.eq.s32.totalorder %s19, 0
      %p165 = por %p163, %p164
      %p166 = scmp.ne.s32.totalorder %s152, %s153
      %p167 = scmp.eq.s32.totalorder %s20, 1
      %p168 = por %p166, %p167
      %p170 = scmp.ne.s32.totalorder %s153, %s169
      %p171 = scmp.eq.s32.totalorder %s20, 0
      %p172 = por %p170, %p171
      %s173 = ssub.s32 %s21, %s40
      %s174 = ssub.s32 %s22, %s36
      %s175 = sor.u32 %s173, %s174
      %p176 = scmp.eq.s32.totalorder %s175, 0
      %s178 = sadd.s32 %s177, 1
      %s179 = scalar_select %p176, %s177, %s178
      %p182 = pneg %p176
      %p183 = scmp.eq.s32.totalorder %s14, 1
      %p184 = por %p182, %p183
      %p185 = scmp.ne.s32.totalorder %s177, %s180
      %p186 = scmp.eq.s32.totalorder %s14, 0
      %p187 = por %p185, %p186
      %p188 = scmp.ne.s32.totalorder %s177, %s180
      %p189 = scmp.eq.s32.totalorder %s19, 1
      %p190 = por %p188, %p189
      %p191 = scmp.ne.s32.totalorder %s180, %s181
      %p192 = scmp.eq.s32.totalorder %s19, 0
      %p193 = por %p191, %p192
      %p194 = scmp.ne.s32.totalorder %s180, %s181
      %p195 = scmp.eq.s32.totalorder %s20, 1
      %p196 = por %p194, %p195
      %p198 = scmp.ne.s32.totalorder %s181, %s197
      %p199 = scmp.eq.s32.totalorder %s20, 0
      %p200 = por %p198, %p199
      %p201 = scmp.le.s32.totalorder 1, %s14
      %p202 = scmp.lt.s32.totalorder %s14, 3
      %p203 = pnand %p201, %p202
      %p204 = pneg %p203
      // Predicated region
      $region9: #{tpu_custom_call.1} parent=5 // pred_check
        _
      $region10: #{tpu_custom_call.1} parent=5 // pred_check_branch
        %206 = sbr.rel (%p203) target = $region12
      $region11: #{tpu_custom_call.1} parent=5 // pred_region
        %s207 = ssub.s32 %s14, 1
        // Predicated region
        $region13: #{tpu_custom_call.1} parent=11 // pred_check
          %p208 = pneg %p85
        $region14: #{tpu_custom_call.1} parent=11 // pred_check_branch
          %210 = sbr.rel (%p208) target = $region16
        $region15: #{tpu_custom_call.1} parent=11 // pred_region
          %p211 = scmp.lt.s32.totalorder %s26, 0
          %s212 = scalar_select %p211, %s26, 0
          %s213 = smul.addr %s212, 8
          %s214 = scalar_lea.vmem %s1, %s213
        $region16: #{tpu_custom_call.1} parent=11 // pred_fallthru
          _
        // Predicated region
        $region17: #{tpu_custom_call.1} parent=11 // pred_check
          %p215 = pneg %p111
        $region18: #{tpu_custom_call.1} parent=11 // pred_check_branch
          %217 = sbr.rel (%p215) target = $region20
        $region19: #{tpu_custom_call.1} parent=11 // pred_region
          %p218 = scmp.lt.s32.totalorder %s26, 0
          %s219 = scalar_select %p218, %s26, 0
          %s220 = scalar_lea.vmem %s2, %s219
        $region20: #{tpu_custom_call.1} parent=11 // pred_fallthru
          _
        // Predicated region
        $region21: #{tpu_custom_call.1} parent=11 // pred_check
          %p221 = pneg %p139
        $region22: #{tpu_custom_call.1} parent=11 // pred_check_branch
          %223 = sbr.rel (%p221) target = $region24
        $region23: #{tpu_custom_call.1} parent=11 // pred_region
          %s224 = smul.u32 8, %s26
          %p225 = scmp.lt.s32.totalorder %s224, 7
          %s226 = scalar_select %p225, %s224, 7
          %p227 = scmp.lt.s32.totalorder %s25, 0
          %s228 = scalar_select %p227, %s25, 0
          %s229 = sadd.s32 %s228, %s226
          %s230 = smul.addr %s229, 8
          %s231 = scalar_lea.vmem %s3, %s230
          %s232 = smul.u32 8, %s26
        $region24: #{tpu_custom_call.1} parent=11 // pred_fallthru
          _
        // Predicated region
        $region25: #{tpu_custom_call.1} parent=11 // pred_check
          %p233 = pneg %p165
        $region26: #{tpu_custom_call.1} parent=11 // pred_check_branch
          %235 = sbr.rel (%p233) target = $region28
        $region27: #{tpu_custom_call.1} parent=11 // pred_region
          %p236 = scmp.lt.s32.totalorder %s25, 0
          %s237 = scalar_select %p236, %s25, 0
          %s238 = scalar_lea.vmem %s4, %s237
        $region28: #{tpu_custom_call.1} parent=11 // pred_fallthru
          _
      $region12: #{tpu_custom_call.1} parent=5 // pred_fallthru
        _
      %p239 = scmp.lt.s32.totalorder %s14, 2
      // Predicated region
      $region29: #{tpu_custom_call.1} parent=5 // pred_check
        %p240 = pneg %p239
      $region30: #{tpu_custom_call.1} parent=5 // pred_check_branch
        %242 = sbr.rel (%p240) target = $region32
      $region31: #{tpu_custom_call.1} parent=5 // pred_region
        // Predicated region
        $region33: #{tpu_custom_call.1} parent=31 // pred_check
          %p243 = pneg %p53
        $region34: #{tpu_custom_call.1} parent=31 // pred_check_branch
          %245 = sbr.rel (%p243) target = $region36
        $region35: #{tpu_custom_call.1} parent=31 // pred_region
          %p246 = scmp.lt.s32.totalorder %s21, 1
          %s247 = scalar_select %p246, %s21, 1
          %s248 = smul.addr %s247, 8
          %s249 = scalar_lea.vmem %s0, %s248
        $region36: #{tpu_custom_call.1} parent=31 // pred_fallthru
          _
      $region32: #{tpu_custom_call.1} parent=5 // pred_fallthru
        _
      %p250 = scmp.le.s32.totalorder 1, %s14
      %p251 = scmp.lt.s32.totalorder %s14, 3
      %p252 = pnand %p250, %p251
      %p253 = pneg %p252
      // Predicated region
      $region37: #{tpu_custom_call.1} parent=5 // pred_check
        _
      $region38: #{tpu_custom_call.1} parent=5 // pred_check_branch
        %255 = sbr.rel (%p252) target = $region40
      $region39: #{tpu_custom_call.1} parent=5 // pred_region
        %s256 = ssub.s32 %s14, 1
        %p257 = scmp.lt.s32.totalorder %s24, 1
        %s258 = scalar_select %p257, %s24, 1
        %s259 = smul.addr %s258, 8
        %s260 = scalar_lea.vmem %s0, %s259
        %p261 = pneg %p59
        %p262 = pneg %p56
        %p263 = scmp.lt.s32.totalorder %s26, 0
        %s264 = scalar_select %p263, %s26, 0
        %s265 = smul.addr %s264, 8
        %s266 = scalar_lea.vmem %s1, %s265
        %p267 = pneg %p85
        %p268 = pneg %p82
        %p269 = scmp.lt.s32.totalorder %s26, 0
        %s270 = scalar_select %p269, %s26, 0
        %s271 = scalar_lea.vmem %s2, %s270
        %p272 = pneg %p111
        %p273 = pneg %p108
        %s274 = smul.u32 8, %s26
        %p275 = scmp.lt.s32.totalorder %s274, 7
        %s276 = scalar_select %p275, %s274, 7
        %p277 = scmp.lt.s32.totalorder %s25, 0
        %s278 = scalar_select %p277, %s25, 0
        %s279 = sadd.s32 %s278, %s276
        %s280 = smul.addr %s279, 8
        %s281 = scalar_lea.vmem %s3, %s280
        %p282 = pneg %p139
        %p283 = pneg %p136
        %p284 = scmp.lt.s32.totalorder %s25, 0
        %s285 = scalar_select %p284, %s25, 0
        %s286 = scalar_lea.vmem %s4, %s285
        %p287 = pneg %p165
        %p288 = pneg %p162
        %p289 = pneg %p193
        %p290 = pneg %p190
        %s291 = sand.u32 %s180, 1
        %s292 = scalar_lea.sflag [#allocation3], %s291
        %s293 = sand.u32 %s180, 1
        %s294 = smul.addr %s293, 8
        %s295 = scalar_lea.vmem [#allocation2], %s294
        %p296 = scmp.lt.s32.totalorder %s24, 1
        %s297 = scalar_select %p296, %s24, 1
        %s298 = smul.addr %s297, 8
        %s299 = scalar_lea.vmem %s0, %s298
        %p300 = scmp.lt.s32.totalorder %s26, 0
        %s301 = scalar_select %p300, %s26, 0
        %s302 = smul.addr %s301, 8
        %s303 = scalar_lea.vmem %s1, %s302
        %p304 = scmp.lt.s32.totalorder %s26, 0
        %s305 = scalar_select %p304, %s26, 0
        %s306 = scalar_lea.vmem %s2, %s305
        %s307 = smul.u32 8, %s26
        %p308 = scmp.lt.s32.totalorder %s307, 7
        %s309 = scalar_select %p308, %s307, 7
        %p310 = scmp.lt.s32.totalorder %s25, 0
        %s311 = scalar_select %p310, %s25, 0
        %s312 = sadd.s32 %s311, %s309
        %s313 = smul.addr %s312, 8
        %s314 = scalar_lea.vmem %s3, %s313
        %s315 = smul.u32 8, %s26
        %p316 = scmp.lt.s32.totalorder %s25, 0
        %s317 = scalar_select %p316, %s25, 0
        %s318 = scalar_lea.vmem %s4, %s317
        %p319 = scmp.eq.s32.totalorder %s26, 0
        // Predicated region
        $region41: #{tpu_custom_call.1} parent=39 // pred_check
          %p320 = pneg %p319
        $region42: #{tpu_custom_call.1} parent=39 // pred_check_branch
          %322 = sbr.rel (%p320) target = $region44
        $region43: #{tpu_custom_call.1} parent=39 // pred_region
          %v323 = vld [vmem:[%s318] sm:$0x1]
          %v325 = vlaneseq
          %v326 = vshrl.u32 %v325, 7
          %v327 = vsub.s32 0, %v326
          %v328 = vrot.slane %v323, %v327
          %vm330 = vcmask 261120
          %331 = vst.msk [vmem:[%s295] sm:$0xff] %vm330, %v328
        $region44: #{tpu_custom_call.1} parent=39 // pred_fallthru
          _
        %v332 = vld [vmem:[%s299] sm:$0xff]
        %v333 = vld [vmem:[%s303] sm:$0xff]
        %v334 = vld [vmem:[%s303 + $0x8] sm:$0xff]
        %v335 = vld [vmem:[%s303 + $0x10] sm:$0xff]
        %v336 = vld [vmem:[%s303 + $0x18] sm:$0xff]
        %v337 = vld [vmem:[%s306] sm:$0x1]
        %v339 = vlaneseq
        %v340 = vshrl.u32 %v339, 7
        %v341 = vsub.s32 0, %v340
        %v342 = vrot.slane %v337, %v341
        %vm344 = vcmask 261120
        %v346 = vsel %vm344, %v332, 0
        %348 = vmatprep.subr.mxu0 0.0
        %349 = vmatpush1.msra.mxu0 %v333
        %350 = vmatprep.subr.mxu0 0.0
        %351 = vmatpush1.msra.mxu0 %v334
        %352 = vmatprep.subr.mxu0 0.0
        %353 = vmatpush1.msra.mxu0 %v335
        %354 = vmatprep.subr.mxu0 0.0
        %355 = vmatpush1.msra.mxu0 %v336
        %356 = vmatprep.subr.mxu0 0.0
        %357 = vmatpush1.msra.mxu0 0.0
        %358 = vmatprep.subr.mxu0 0.0
        %359 = vmatpush1.msra.mxu0 0.0
        %360 = vmatprep.subr.mxu0 0.0
        %361 = vmatpush1.msra.mxu0 0.0
        %362 = vmatprep.subr.mxu0 0.0
        %363 = vmatpush1.msra.mxu0 0.0
        %364 = vmatprep.subr.mxu0 0.0
        %365 = vmatpush1.msra.mxu0 0.0
        %366 = vmatprep.subr.mxu0 0.0
        %367 = vmatpush1.msra.mxu0 0.0
        %368 = vmatprep.subr.mxu0 0.0
        %369 = vmatpush1.msra.mxu0 0.0
        %370 = vmatprep.subr.mxu0 0.0
        %371 = vmatpush1.msra.mxu0 0.0
        %372 = vmatprep.subr.mxu0 0.0
        %373 = vmatpush1.msra.mxu0 0.0
        %374 = vmatprep.subr.mxu0 0.0
        %375 = vmatpush1.msra.mxu0 0.0
        %376 = vmatprep.subr.mxu0 0.0
        %377 = vmatpush1.msra.mxu0 0.0
        %378 = vmatprep.subr.mxu0 0.0
        %379 = vmatpush1.msra.mxu0 0.0
        %380 = vmatprep.subr.mxu0 0.0
        %381 = vmatpush1.msra.mxu0 0.0
        %382 = vmatprep.subr.mxu0 0.0
        %383 = vmatpush1.msra.mxu0 0.0
        %384 = vmatprep.subr.mxu0 0.0
        %385 = vmatpush1.msra.mxu0 0.0
        %386 = vmatprep.subr.mxu0 0.0
        %387 = vmatpush1.msra.mxu0 0.0
        %388 = vmatprep.subr.mxu0 0.0
        %389 = vmatpush1.msra.mxu0 0.0
        %390 = vmatprep.subr.mxu0 0.0
        %391 = vmatpush1.msra.mxu0 0.0
        %392 = vmatprep.subr.mxu0 0.0
        %393 = vmatpush1.msra.mxu0 0.0
        %394 = vmatprep.subr.mxu0 0.0
        %395 = vmatpush1.msra.mxu0 0.0
        %396 = vmatprep.subr.mxu0 0.0
        %397 = vmatpush1.msra.mxu0 0.0
        %398 = vmatprep.subr.mxu0 0.0
        %399 = vmatpush1.msra.mxu0 0.0
        %400 = vmatprep.subr.mxu0 0.0
        %401 = vmatpush1.msra.mxu0 0.0
        %402 = vmatprep.subr.mxu0 0.0
        %403 = vmatpush1.msra.mxu0 0.0
        %404 = vmatprep.subr.mxu0 0.0
        %405 = vmatpush1.msra.mxu0 0.0
        %406 = vmatprep.subr.mxu0 0.0
        %407 = vmatpush1.msra.mxu0 0.0
        %408 = vmatprep.subr.mxu0 0.0
        %409 = vmatpush1.msra.mxu0 0.0
        %410 = vmatprep.subr.mxu0 0.0
        %411 = vmatpush1.msra.mxu0 0.0
        %412 = vmatprep.mubr.f32.mxu0 0.0
        %413 = vmatmul.mubr.f32.gmra.mrb[0].mxu0 %v346
        %v414 = vpop.f32.mrb[0].mxu0
        %v415 = vadd.f32 %v342, %v414
        %v416 = vpop.f32.mrb[0].mxu0
        %417 = vdwg.mxu0
        %v418 = vmax.f32 %v415, 0.0
        %v419 = vld [vmem:[%s295] sm:$0xff]
        %v420 = vld [vmem:[%s314] sm:$0xff]
        %v421 = vld [vmem:[%s314 + $0x8] sm:$0xff]
        %v422 = vld [vmem:[%s314 + $0x10] sm:$0xff]
        %v423 = vld [vmem:[%s314 + $0x18] sm:$0xff]
        %v424 = vld [vmem:[%s314 + $0x20] sm:$0xff]
        %v425 = vld [vmem:[%s314 + $0x28] sm:$0xff]
        %v426 = vld [vmem:[%s314 + $0x30] sm:$0xff]
        %v427 = vld [vmem:[%s314 + $0x38] sm:$0xff]
        %vm428 = vcmask 523264
        %v430 = vsel %vm428, %v418, 0
        %432 = vmatprep.subr.mxu0 0.0
        %433 = vmatpush1.msra.mxu0 %v420
        %434 = vmatprep.subr.mxu0 0.0
        %435 = vmatpush1.msra.mxu0 %v421
        %436 = vmatprep.subr.mxu0 0.0
        %437 = vmatpush1.msra.mxu0 %v422
        %438 = vmatprep.subr.mxu0 0.0
        %439 = vmatpush1.msra.mxu0 %v423
        %440 = vmatprep.subr.mxu0 0.0
        %441 = vmatpush1.msra.mxu0 %v424
        %442 = vmatprep.subr.mxu0 0.0
        %443 = vmatpush1.msra.mxu0 %v425
        %444 = vmatprep.subr.mxu0 0.0
        %445 = vmatpush1.msra.mxu0 %v426
        %446 = vmatprep.subr.mxu0 0.0
        %447 = vmatpush1.msra.mxu0 %v427
        %448 = vmatprep.subr.mxu0 0.0
        %449 = vmatpush1.msra.mxu0 0.0
        %450 = vmatprep.subr.mxu0 0.0
        %451 = vmatpush1.msra.mxu0 0.0
        %452 = vmatprep.subr.mxu0 0.0
        %453 = vmatpush1.msra.mxu0 0.0
        %454 = vmatprep.subr.mxu0 0.0
        %455 = vmatpush1.msra.mxu0 0.0
        %456 = vmatprep.subr.mxu0 0.0
        %457 = vmatpush1.msra.mxu0 0.0
        %458 = vmatprep.subr.mxu0 0.0
        %459 = vmatpush1.msra.mxu0 0.0
        %460 = vmatprep.subr.mxu0 0.0
        %461 = vmatpush1.msra.mxu0 0.0
        %462 = vmatprep.subr.mxu0 0.0
        %463 = vmatpush1.msra.mxu0 0.0
        %464 = vmatprep.subr.mxu0 0.0
        %465 = vmatpush1.msra.mxu0 0.0
        %466 = vmatprep.subr.mxu0 0.0
        %467 = vmatpush1.msra.mxu0 0.0
        %468 = vmatprep.subr.mxu0 0.0
        %469 = vmatpush1.msra.mxu0 0.0
        %470 = vmatprep.subr.mxu0 0.0
        %471 = vmatpush1.msra.mxu0 0.0
        %472 = vmatprep.subr.mxu0 0.0
        %473 = vmatpush1.msra.mxu0 0.0
        %474 = vmatprep.subr.mxu0 0.0
        %475 = vmatpush1.msra.mxu0 0.0
        %476 = vmatprep.subr.mxu0 0.0
        %477 = vmatpush1.msra.mxu0 0.0
        %478 = vmatprep.subr.mxu0 0.0
        %479 = vmatpush1.msra.mxu0 0.0
        %480 = vmatprep.subr.mxu0 0.0
        %481 = vmatpush1.msra.mxu0 0.0
        %482 = vmatprep.subr.mxu0 0.0
        %483 = vmatpush1.msra.mxu0 0.0
        %484 = vmatprep.subr.mxu0 0.0
        %485 = vmatpush1.msra.mxu0 0.0
        %486 = vmatprep.subr.mxu0 0.0
        %487 = vmatpush1.msra.mxu0 0.0
        %488 = vmatprep.subr.mxu0 0.0
        %489 = vmatpush1.msra.mxu0 0.0
        %490 = vmatprep.subr.mxu0 0.0
        %491 = vmatpush1.msra.mxu0 0.0
        %492 = vmatprep.subr.mxu0 0.0
        %493 = vmatpush1.msra.mxu0 0.0
        %494 = vmatprep.subr.mxu0 0.0
        %495 = vmatpush1.msra.mxu0 0.0
        %496 = vmatprep.mubr.f32.mxu0 0.0
        %497 = vmatmul.mubr.f32.gmra.mrb[0].mxu0 %v430
        %v498 = vpop.f32.mrb[0].mxu0
        %v499 = vadd.f32 0.0, %v498
        %v500 = vpop.f32.mrb[0].mxu0
        %501 = vdwg.mxu0
        %v502 = vadd.f32 %v419, %v499
        %503 = vst.msk [vmem:[%s295] sm:$0xff] %vm344, %v502
        %s504 = sand.u32 %s180, 1
        %s505 = scalar_lea.sflag [#allocation3], %s504
        %s506 = sand.u32 %s180, 1
        %s507 = smul.addr %s506, 8
        %s508 = scalar_lea.vmem [#allocation2], %s507
        // Predicated region
        $region45: #{tpu_custom_call.1} parent=39 // pred_check
          %p509 = pneg %p190
        $region46: #{tpu_custom_call.1} parent=39 // pred_check_branch
          %511 = sbr.rel (%p509) target = $region48
        $region47: #{tpu_custom_call.1} parent=39 // pred_region
          %s513 = ssub.s32 128, 128
          %514 = vsyncadd %s505, %s513
          %s515 = sadd.s32 %s25, %s24
          %s516 = smul.addr %s515, 128
          %s517 = scalar_lea.hbm %s5, %s516
          %s519 = sshll.u32 %s508, 4
          %s520 = int_to_ptr.vmem [resolvable:$true] %s519
          %522 = dma.vmem_to_hbm [thread:$0]  %s520, 128, %s517, %s505
        $region48: #{tpu_custom_call.1} parent=39 // pred_fallthru
          _
      $region40: #{tpu_custom_call.1} parent=5 // pred_fallthru
        _
      %p523 = scmp.le.s32.totalorder 2, %s14
      // Predicated region
      $region49: #{tpu_custom_call.1} parent=5 // pred_check
        %p524 = pneg %p523
      $region50: #{tpu_custom_call.1} parent=5 // pred_check_branch
        %526 = sbr.rel (%p524) target = $region52
      $region51: #{tpu_custom_call.1} parent=5 // pred_region
        %s527 = ssub.s32 %s14, 2
        // Predicated region
        $region53: #{tpu_custom_call.1} parent=51 // pred_check
          %p528 = pneg %p196
        $region54: #{tpu_custom_call.1} parent=51 // pred_check_branch
          %530 = sbr.rel (%p528) target = $region56
        $region55: #{tpu_custom_call.1} parent=51 // pred_region
          %s531 = sand.u32 %s181, 1
          %s532 = scalar_lea.sflag [#allocation3], %s531
          %s533 = sand.u32 %s181, 1
          %s534 = smul.addr %s533, 8
          %s535 = scalar_lea.vmem [#allocation2], %s534
          %536 = dma.done %s532, 128
        $region56: #{tpu_custom_call.1} parent=51 // pred_fallthru
          _
      $region52: #{tpu_custom_call.1} parent=5 // pred_fallthru
        _
    $region6: #{tpu_custom_call.1} parent=1 // loop_footer
      %s18 = sadd.s32 1, %s14
    $region7: #{tpu_custom_call.1} parent=1 // loop_footer_branch
      %13 = sbr.rel target = $region3
    $region8: #{tpu_custom_call.1} parent=1 // loop_exit
      _
    %537 = vsyncpa [#allocation3], 1
    %s538 = scalar_lea.sflag [#allocation3], 1
    %539 = vsyncpa %s538, 1

</llo_original>
